<compile_context>
chip_gen: v5e
topology: v5e:2x2
jax: 0.10.0
libtpu: 0.0.40
codegen_flags: <defaults>
</compile_context>

<pallas_src>
import functools

import jax
import jax.numpy as jnp
from jax import lax
from jax.experimental import pallas as pl
from jax.experimental.pallas import tpu as pltpu

VARIANCE_EPS = 1e-12
_GATHER_UNROLL = 8   # DMA issues / waits per loop iteration


def _round_up(x, m):
    return (x + m - 1) // m * m


def _bert_embeddings_kernel(word_ids_smem,              # (Np,) int32 SMEM (scalar prefetch)
                            type_ids_ref, tag_ids_ref,  # (TN, 1) int32 VMEM
                            word_hbm_ref,               # (V_word, H) f32, stays in HBM
                            small_tbl_ref,              # (V_small, H) f32 VMEM (pos|type|tag)
                            gamma_ref, beta_ref,        # (1, H) f32
                            out_ref,                    # (TN, H) f32
                            wbuf_ref,                   # (TN, H) f32 VMEM scratch (word rows)
                            sem_ref,                    # (1,) DMA semaphore
                            *, seq_len, type_offset, tag_offset):
    tn, _ = out_ref.shape
    v_small = small_tbl_ref.shape[0]
    vocab = word_hbm_ref.shape[0]
    base = pl.program_id(0) * tn
    n_chunks = tn // _GATHER_UNROLL

    # ---- 1. word-embedding gather: one row DMA per token, HBM -> VMEM -------
    # Issued first so the copies are in flight while step 2 runs on MXU/VPU.
    @pl.loop(0, n_chunks)
    def _(c):
        r0 = pl.multiple_of(c * _GATHER_UNROLL, _GATHER_UNROLL)
        for j in range(_GATHER_UNROLL):
            r = r0 + j
            idx = jnp.clip(word_ids_smem[base + r], 0, vocab - 1)
            pltpu.make_async_copy(
                word_hbm_ref.at[pl.ds(idx, 1), :],
                wbuf_ref.at[pl.ds(r, 1), :],
                sem_ref.at[0],
            ).start()

    # ---- 2. fused small tables while the gather DMAs are in flight ----------
    # position contribution is deterministic: position_id = global_row % S.
    row = base + lax.broadcasted_iota(jnp.int32, (tn, 1), 0)
    pos_ids = row % seq_len
    typ_ids = type_ids_ref[...] + type_offset
    tag_ids = tag_ids_ref[...] + tag_offset
    col = lax.broadcasted_iota(jnp.int32, (tn, v_small), 1)
    multi_hot = ((col == pos_ids) | (col == typ_ids) | (col == tag_ids)
                 ).astype(jnp.float32)
    small_sum = jnp.dot(multi_hot, small_tbl_ref[...],
                        preferred_element_type=jnp.float32)

    # ---- 3. wait for the gathered word rows (one wait per issued copy; the
    # dummy descriptor only has to match the copy shape) ----------------------
    @pl.loop(0, n_chunks)
    def _(c):
        for _j in range(_GATHER_UNROLL):
            pltpu.make_async_copy(
                word_hbm_ref.at[pl.ds(0, 1), :],
                wbuf_ref.at[pl.ds(0, 1), :],
                sem_ref.at[0],
            ).wait()

    x = wbuf_ref[...] + small_sum

    # ---- 4. TF-style LayerNorm (eps inside the sqrt) + affine ---------------
    u = jnp.mean(x, axis=-1, keepdims=True)
    xc = x - u
    s = jnp.mean(xc * xc, axis=-1, keepdims=True)
    y = xc * lax.rsqrt(s + VARIANCE_EPS)
    out_ref[...] = gamma_ref[...] * y + beta_ref[...]


def custom_bert_embeddings(params, input_ids, token_type_ids=None,
                           pos_tag_ids=None, *, block_rows=512):
    B, S = input_ids.shape
    H = params["word_embeddings"].shape[1]
    N = B * S

    if token_type_ids is None:
        token_type_ids = jnp.zeros_like(input_ids)
    if pos_tag_ids is None:
        pos_tag_ids = jnp.zeros_like(input_ids)

    # Row tile: multiple of 8 sublanes (also a multiple of _GATHER_UNROLL).
    tn = _round_up(min(block_rows, N), 8)
    n_pad = _round_up(N, tn)
    num_blocks = n_pad // tn

    def _flat(ids):
        ids = jnp.ravel(ids).astype(jnp.int32)
        if n_pad != N:
            ids = jnp.pad(ids, (0, n_pad - N))
        return ids

    word_ids = _flat(input_ids)                       # -> SMEM via scalar prefetch
    type_ids = _flat(token_type_ids).reshape(n_pad, 1)
    tag_ids = _flat(pos_tag_ids).reshape(n_pad, 1)

    word_tbl = params["word_embeddings"].astype(jnp.float32)          # stays in HBM
    pos_tbl = params["position_embeddings"].astype(jnp.float32)
    typ_tbl = params["token_type_embeddings"].astype(jnp.float32)
    tag_tbl = params["pos_tag_embeddings"].astype(jnp.float32)
    small_tbl = jnp.concatenate([pos_tbl, typ_tbl, tag_tbl], axis=0)  # (V_small, H)
    v_small = small_tbl.shape[0]
    type_offset = pos_tbl.shape[0]
    tag_offset = type_offset + typ_tbl.shape[0]

    gamma = params["gamma"].reshape(1, H).astype(jnp.float32)
    beta = params["beta"].reshape(1, H).astype(jnp.float32)

    kernel = functools.partial(_bert_embeddings_kernel,
                               seq_len=S,
                               type_offset=type_offset,
                               tag_offset=tag_offset)

    grid_spec = pltpu.PrefetchScalarGridSpec(
        num_scalar_prefetch=1,
        grid=(num_blocks,),
        in_specs=[
            pl.BlockSpec((tn, 1), lambda i, ids: (i, 0)),        # token_type ids
            pl.BlockSpec((tn, 1), lambda i, ids: (i, 0)),        # pos_tag ids
            pl.BlockSpec(memory_space=pl.ANY),                   # word table (HBM, manual DMA)
            pl.BlockSpec((v_small, H), lambda i, ids: (0, 0)),   # fused small table (resident)
            pl.BlockSpec((1, H), lambda i, ids: (0, 0)),         # gamma
            pl.BlockSpec((1, H), lambda i, ids: (0, 0)),         # beta
        ],
        out_specs=pl.BlockSpec((tn, H), lambda i, ids: (i, 0)),
        scratch_shapes=[
            pltpu.VMEM((tn, H), jnp.float32),       # gathered word rows
            pltpu.SemaphoreType.DMA((1,)),          # gather completion semaphore
        ],
    )

    out = pl.pallas_call(
        kernel,
        out_shape=jax.ShapeDtypeStruct((n_pad, H), jnp.float32),
        grid_spec=grid_spec,
        compiler_params=pltpu.CompilerParams(
            dimension_semantics=("parallel",)),
    )(word_ids, type_ids, tag_ids, word_tbl, small_tbl, gamma, beta)

    return out[:N].reshape(B, S, H)


def _reference(params, input_ids, token_type_ids, pos_tag_ids):
    B, S = input_ids.shape
    position_ids = jnp.broadcast_to(jnp.arange(S)[None, :], (B, S))
    x = (params["word_embeddings"][input_ids]
         + params["position_embeddings"][position_ids]
         + params["token_type_embeddings"][token_type_ids]
         + params["pos_tag_embeddings"][pos_tag_ids])
    u = jnp.mean(x, axis=-1, keepdims=True)
    s = jnp.mean((x - u) ** 2, axis=-1, keepdims=True)
    x = (x - u) / jnp.sqrt(s + VARIANCE_EPS)
    return params["gamma"] * x + params["beta"]


if __name__ == "__main__":
    # small synthetic config
    batch, seq, hidden = 2, 8, 32
    vocab_size = 64
    max_position_embeddings = 16
    type_vocab_size = 2
    pos_tag_size = 8

    key = jax.random.PRNGKey(0)
    k_w, k_p, k_t, k_g, k_ids, k_type, k_tag = jax.random.split(key, 7)

    params = {
        "word_embeddings": jax.random.normal(k_w, (vocab_size, hidden), jnp.float32) * 0.02,
        "position_embeddings": jax.random.normal(k_p, (max_position_embeddings, hidden), jnp.float32) * 0.02,
        "token_type_embeddings": jax.random.normal(k_t, (type_vocab_size, hidden), jnp.float32) * 0.02,
        "pos_tag_embeddings": jax.random.normal(k_g, (pos_tag_size, hidden), jnp.float32) * 0.02,
        "gamma": jnp.ones((hidden,), jnp.float32),
        "beta": jnp.zeros((hidden,), jnp.float32),
    }

    input_ids = jax.random.randint(k_ids, (batch, seq), 0, vocab_size, jnp.int32)
    token_type_ids = jax.random.randint(k_type, (batch, seq), 0, type_vocab_size, jnp.int32)
    pos_tag_ids = jax.random.randint(k_tag, (batch, seq), 0, pos_tag_size, jnp.int32)

    out = custom_bert_embeddings(params, input_ids, token_type_ids, pos_tag_ids)
    out = jax.block_until_ready(out)

    ref = _reference(params, input_ids, token_type_ids, pos_tag_ids)
    assert out.shape == (batch, seq, hidden)
    assert jnp.allclose(out, ref, atol=1e-4, rtol=1e-4)

    print("KERNEL_OK")
</pallas_src>

<mosaic_0001>
module attributes {stable_mosaic.version = 11 : i64} {
  func.func @_bert_embeddings_kernel(%arg0: i32, %arg1: memref<16xi32, #tpu.memory_space<smem>>, %arg2: memref<16x1xi32, #tpu.memory_space<vmem>>, %arg3: memref<16x1xi32, #tpu.memory_space<vmem>>, %arg4: memref<64x32xf32, #tpu.memory_space<any>>, %arg5: memref<26x32xf32, #tpu.memory_space<vmem>>, %arg6: memref<1x32xf32, #tpu.memory_space<vmem>>, %arg7: memref<1x32xf32, #tpu.memory_space<vmem>>, %arg8: memref<16x32xf32, #tpu.memory_space<vmem>>, %arg9: memref<16x32xf32, #tpu.memory_space<vmem>>, %arg10: memref<1x!tpu.dma_semaphore, #tpu.memory_space<semaphore_mem>>) attributes {dimension_semantics = [#tpu.dimension_semantics<parallel>], iteration_bounds = array<i64: 1>, scalar_prefetch = 1 : i64, scratch_operands = 2 : i64, tpu.core_type = #tpu.core_type<tc>, window_params = [{transform_indices = @transform_0, window_bounds = array<i64: 16, 1>}, {transform_indices = @transform_1, window_bounds = array<i64: 16, 1>}, {}, {pipeline_mode = #tpu.pipeline_mode<synchronous>, transform_indices = @transform_3, window_bounds = array<i64: 26, 32>}, {pipeline_mode = #tpu.pipeline_mode<synchronous>, transform_indices = @transform_4, window_bounds = array<i64: 1, 32>}, {pipeline_mode = #tpu.pipeline_mode<synchronous>, transform_indices = @transform_5, window_bounds = array<i64: 1, 32>}, {transform_indices = @transform_6, window_bounds = array<i64: 16, 32>}]} {
    %c16_i32 = arith.constant 16 : i32
    %0 = arith.muli %arg0, %c16_i32 : i32
    %c0_i32 = arith.constant 0 : i32
    %c2_i32 = arith.constant 2 : i32
    %1 = arith.addi %c0_i32, %c2_i32 : i32
    %c1_i32 = arith.constant 1 : i32
    scf.for %arg11 = %c0_i32 to %1 step %c1_i32  : i32 {
      %c1_i32_28 = arith.constant 1 : i32
      %66 = arith.muli %arg11, %c1_i32_28 : i32
      %c0_i32_29 = arith.constant 0 : i32
      %67 = arith.addi %c0_i32_29, %66 : i32
      %c8_i32_30 = arith.constant 8 : i32
      %68 = arith.muli %67, %c8_i32_30 : i32
      %69 = tpu.assume_multiple %68, 8 : i32
      %c0_i32_31 = arith.constant 0 : i32
      %70 = arith.addi %69, %c0_i32_31 : i32
      %71 = arith.addi %0, %70 : i32
      %72 = arith.index_cast %71 : i32 to index
      %73 = memref.load %arg1[%72] : memref<16xi32, #tpu.memory_space<smem>>
      %c0_i32_32 = arith.constant 0 : i32
      %c63_i32 = arith.constant 63 : i32
      %74 = arith.maxsi %c0_i32_32, %73 : i32
      %75 = arith.minsi %c63_i32, %74 : i32
      %c0_i32_33 = arith.constant 0 : i32
      %c0_i32_34 = arith.constant 0 : i32
      %76 = tpu.memref_slice %arg4[%75, %c0_i32_34] : memref<64x32xf32, #tpu.memory_space<any>> -> memref<1x32xf32, #tpu.memory_space<any>>
      %c0_i32_35 = arith.constant 0 : i32
      %77 = tpu.memref_slice %arg9[%70, %c0_i32_35] : memref<16x32xf32, #tpu.memory_space<vmem>> -> memref<1x32xf32, #tpu.memory_space<vmem>>
      %78 = tpu.memref_slice %arg10[%c0_i32_33] : memref<1x!tpu.dma_semaphore, #tpu.memory_space<semaphore_mem>> -> memref<1x!tpu.dma_semaphore, #tpu.memory_space<semaphore_mem>>
      %79 = tpu.memref_squeeze %78 : memref<1x!tpu.dma_semaphore, #tpu.memory_space<semaphore_mem>> -> memref<!tpu.dma_semaphore, #tpu.memory_space<semaphore_mem>>
      tpu.enqueue_dma source(%76 : memref<1x32xf32, #tpu.memory_space<any>>) target(%77 : memref<1x32xf32, #tpu.memory_space<vmem>>) target_semaphore(%79 : memref<!tpu.dma_semaphore, #tpu.memory_space<semaphore_mem>>)
      %c1_i32_36 = arith.constant 1 : i32
      %80 = arith.addi %69, %c1_i32_36 : i32
      %81 = arith.addi %0, %80 : i32
      %82 = arith.index_cast %81 : i32 to index
      %83 = memref.load %arg1[%82] : memref<16xi32, #tpu.memory_space<smem>>
      %c0_i32_37 = arith.constant 0 : i32
      %c63_i32_38 = arith.constant 63 : i32
      %84 = arith.maxsi %c0_i32_37, %83 : i32
      %85 = arith.minsi %c63_i32_38, %84 : i32
      %c0_i32_39 = arith.constant 0 : i32
      %c0_i32_40 = arith.constant 0 : i32
      %86 = tpu.memref_slice %arg4[%85, %c0_i32_40] : memref<64x32xf32, #tpu.memory_space<any>> -> memref<1x32xf32, #tpu.memory_space<any>>
      %c0_i32_41 = arith.constant 0 : i32
      %87 = tpu.memref_slice %arg9[%80, %c0_i32_41] : memref<16x32xf32, #tpu.memory_space<vmem>> -> memref<1x32xf32, #tpu.memory_space<vmem>>
      %88 = tpu.memref_slice %arg10[%c0_i32_39] : memref<1x!tpu.dma_semaphore, #tpu.memory_space<semaphore_mem>> -> memref<1x!tpu.dma_semaphore, #tpu.memory_space<semaphore_mem>>
      %89 = tpu.memref_squeeze %88 : memref<1x!tpu.dma_semaphore, #tpu.memory_space<semaphore_mem>> -> memref<!tpu.dma_semaphore, #tpu.memory_space<semaphore_mem>>
      tpu.enqueue_dma source(%86 : memref<1x32xf32, #tpu.memory_space<any>>) target(%87 : memref<1x32xf32, #tpu.memory_space<vmem>>) target_semaphore(%89 : memref<!tpu.dma_semaphore, #tpu.memory_space<semaphore_mem>>)
      %c2_i32_42 = arith.constant 2 : i32
      %90 = arith.addi %69, %c2_i32_42 : i32
      %91 = arith.addi %0, %90 : i32
      %92 = arith.index_cast %91 : i32 to index
      %93 = memref.load %arg1[%92] : memref<16xi32, #tpu.memory_space<smem>>
      %c0_i32_43 = arith.constant 0 : i32
      %c63_i32_44 = arith.constant 63 : i32
      %94 = arith.maxsi %c0_i32_43, %93 : i32
      %95 = arith.minsi %c63_i32_44, %94 : i32
      %c0_i32_45 = arith.constant 0 : i32
      %c0_i32_46 = arith.constant 0 : i32
      %96 = tpu.memref_slice %arg4[%95, %c0_i32_46] : memref<64x32xf32, #tpu.memory_space<any>> -> memref<1x32xf32, #tpu.memory_space<any>>
      %c0_i32_47 = arith.constant 0 : i32
      %97 = tpu.memref_slice %arg9[%90, %c0_i32_47] : memref<16x32xf32, #tpu.memory_space<vmem>> -> memref<1x32xf32, #tpu.memory_space<vmem>>
      %98 = tpu.memref_slice %arg10[%c0_i32_45] : memref<1x!tpu.dma_semaphore, #tpu.memory_space<semaphore_mem>> -> memref<1x!tpu.dma_semaphore, #tpu.memory_space<semaphore_mem>>
      %99 = tpu.memref_squeeze %98 : memref<1x!tpu.dma_semaphore, #tpu.memory_space<semaphore_mem>> -> memref<!tpu.dma_semaphore, #tpu.memory_space<semaphore_mem>>
      tpu.enqueue_dma source(%96 : memref<1x32xf32, #tpu.memory_space<any>>) target(%97 : memref<1x32xf32, #tpu.memory_space<vmem>>) target_semaphore(%99 : memref<!tpu.dma_semaphore, #tpu.memory_space<semaphore_mem>>)
      %c3_i32 = arith.constant 3 : i32
      %100 = arith.addi %69, %c3_i32 : i32
      %101 = arith.addi %0, %100 : i32
      %102 = arith.index_cast %101 : i32 to index
      %103 = memref.load %arg1[%102] : memref<16xi32, #tpu.memory_space<smem>>
      %c0_i32_48 = arith.constant 0 : i32
      %c63_i32_49 = arith.constant 63 : i32
      %104 = arith.maxsi %c0_i32_48, %103 : i32
      %105 = arith.minsi %c63_i32_49, %104 : i32
      %c0_i32_50 = arith.constant 0 : i32
      %c0_i32_51 = arith.constant 0 : i32
      %106 = tpu.memref_slice %arg4[%105, %c0_i32_51] : memref<64x32xf32, #tpu.memory_space<any>> -> memref<1x32xf32, #tpu.memory_space<any>>
      %c0_i32_52 = arith.constant 0 : i32
      %107 = tpu.memref_slice %arg9[%100, %c0_i32_52] : memref<16x32xf32, #tpu.memory_space<vmem>> -> memref<1x32xf32, #tpu.memory_space<vmem>>
      %108 = tpu.memref_slice %arg10[%c0_i32_50] : memref<1x!tpu.dma_semaphore, #tpu.memory_space<semaphore_mem>> -> memref<1x!tpu.dma_semaphore, #tpu.memory_space<semaphore_mem>>
      %109 = tpu.memref_squeeze %108 : memref<1x!tpu.dma_semaphore, #tpu.memory_space<semaphore_mem>> -> memref<!tpu.dma_semaphore, #tpu.memory_space<semaphore_mem>>
      tpu.enqueue_dma source(%106 : memref<1x32xf32, #tpu.memory_space<any>>) target(%107 : memref<1x32xf32, #tpu.memory_space<vmem>>) target_semaphore(%109 : memref<!tpu.dma_semaphore, #tpu.memory_space<semaphore_mem>>)
      %c4_i32 = arith.constant 4 : i32
      %110 = arith.addi %69, %c4_i32 : i32
      %111 = arith.addi %0, %110 : i32
      %112 = arith.index_cast %111 : i32 to index
      %113 = memref.load %arg1[%112] : memref<16xi32, #tpu.memory_space<smem>>
      %c0_i32_53 = arith.constant 0 : i32
      %c63_i32_54 = arith.constant 63 : i32
      %114 = arith.maxsi %c0_i32_53, %113 : i32
      %115 = arith.minsi %c63_i32_54, %114 : i32
      %c0_i32_55 = arith.constant 0 : i32
      %c0_i32_56 = arith.constant 0 : i32
      %116 = tpu.memref_slice %arg4[%115, %c0_i32_56] : memref<64x32xf32, #tpu.memory_space<any>> -> memref<1x32xf32, #tpu.memory_space<any>>
      %c0_i32_57 = arith.constant 0 : i32
      %117 = tpu.memref_slice %arg9[%110, %c0_i32_57] : memref<16x32xf32, #tpu.memory_space<vmem>> -> memref<1x32xf32, #tpu.memory_space<vmem>>
      %118 = tpu.memref_slice %arg10[%c0_i32_55] : memref<1x!tpu.dma_semaphore, #tpu.memory_space<semaphore_mem>> -> memref<1x!tpu.dma_semaphore, #tpu.memory_space<semaphore_mem>>
      %119 = tpu.memref_squeeze %118 : memref<1x!tpu.dma_semaphore, #tpu.memory_space<semaphore_mem>> -> memref<!tpu.dma_semaphore, #tpu.memory_space<semaphore_mem>>
      tpu.enqueue_dma source(%116 : memref<1x32xf32, #tpu.memory_space<any>>) target(%117 : memref<1x32xf32, #tpu.memory_space<vmem>>) target_semaphore(%119 : memref<!tpu.dma_semaphore, #tpu.memory_space<semaphore_mem>>)
      %c5_i32 = arith.constant 5 : i32
      %120 = arith.addi %69, %c5_i32 : i32
      %121 = arith.addi %0, %120 : i32
      %122 = arith.index_cast %121 : i32 to index
      %123 = memref.load %arg1[%122] : memref<16xi32, #tpu.memory_space<smem>>
      %c0_i32_58 = arith.constant 0 : i32
      %c63_i32_59 = arith.constant 63 : i32
      %124 = arith.maxsi %c0_i32_58, %123 : i32
      %125 = arith.minsi %c63_i32_59, %124 : i32
      %c0_i32_60 = arith.constant 0 : i32
      %c0_i32_61 = arith.constant 0 : i32
      %126 = tpu.memref_slice %arg4[%125, %c0_i32_61] : memref<64x32xf32, #tpu.memory_space<any>> -> memref<1x32xf32, #tpu.memory_space<any>>
      %c0_i32_62 = arith.constant 0 : i32
      %127 = tpu.memref_slice %arg9[%120, %c0_i32_62] : memref<16x32xf32, #tpu.memory_space<vmem>> -> memref<1x32xf32, #tpu.memory_space<vmem>>
      %128 = tpu.memref_slice %arg10[%c0_i32_60] : memref<1x!tpu.dma_semaphore, #tpu.memory_space<semaphore_mem>> -> memref<1x!tpu.dma_semaphore, #tpu.memory_space<semaphore_mem>>
      %129 = tpu.memref_squeeze %128 : memref<1x!tpu.dma_semaphore, #tpu.memory_space<semaphore_mem>> -> memref<!tpu.dma_semaphore, #tpu.memory_space<semaphore_mem>>
      tpu.enqueue_dma source(%126 : memref<1x32xf32, #tpu.memory_space<any>>) target(%127 : memref<1x32xf32, #tpu.memory_space<vmem>>) target_semaphore(%129 : memref<!tpu.dma_semaphore, #tpu.memory_space<semaphore_mem>>)
      %c6_i32 = arith.constant 6 : i32
      %130 = arith.addi %69, %c6_i32 : i32
      %131 = arith.addi %0, %130 : i32
      %132 = arith.index_cast %131 : i32 to index
      %133 = memref.load %arg1[%132] : memref<16xi32, #tpu.memory_space<smem>>
      %c0_i32_63 = arith.constant 0 : i32
      %c63_i32_64 = arith.constant 63 : i32
      %134 = arith.maxsi %c0_i32_63, %133 : i32
      %135 = arith.minsi %c63_i32_64, %134 : i32
      %c0_i32_65 = arith.constant 0 : i32
      %c0_i32_66 = arith.constant 0 : i32
      %136 = tpu.memref_slice %arg4[%135, %c0_i32_66] : memref<64x32xf32, #tpu.memory_space<any>> -> memref<1x32xf32, #tpu.memory_space<any>>
      %c0_i32_67 = arith.constant 0 : i32
      %137 = tpu.memref_slice %arg9[%130, %c0_i32_67] : memref<16x32xf32, #tpu.memory_space<vmem>> -> memref<1x32xf32, #tpu.memory_space<vmem>>
      %138 = tpu.memref_slice %arg10[%c0_i32_65] : memref<1x!tpu.dma_semaphore, #tpu.memory_space<semaphore_mem>> -> memref<1x!tpu.dma_semaphore, #tpu.memory_space<semaphore_mem>>
      %139 = tpu.memref_squeeze %138 : memref<1x!tpu.dma_semaphore, #tpu.memory_space<semaphore_mem>> -> memref<!tpu.dma_semaphore, #tpu.memory_space<semaphore_mem>>
      tpu.enqueue_dma source(%136 : memref<1x32xf32, #tpu.memory_space<any>>) target(%137 : memref<1x32xf32, #tpu.memory_space<vmem>>) target_semaphore(%139 : memref<!tpu.dma_semaphore, #tpu.memory_space<semaphore_mem>>)
      %c7_i32 = arith.constant 7 : i32
      %140 = arith.addi %69, %c7_i32 : i32
      %141 = arith.addi %0, %140 : i32
      %142 = arith.index_cast %141 : i32 to index
      %143 = memref.load %arg1[%142] : memref<16xi32, #tpu.memory_space<smem>>
      %c0_i32_68 = arith.constant 0 : i32
      %c63_i32_69 = arith.constant 63 : i32
      %144 = arith.maxsi %c0_i32_68, %143 : i32
      %145 = arith.minsi %c63_i32_69, %144 : i32
      %c0_i32_70 = arith.constant 0 : i32
      %c0_i32_71 = arith.constant 0 : i32
      %146 = tpu.memref_slice %arg4[%145, %c0_i32_71] : memref<64x32xf32, #tpu.memory_space<any>> -> memref<1x32xf32, #tpu.memory_space<any>>
      %c0_i32_72 = arith.constant 0 : i32
      %147 = tpu.memref_slice %arg9[%140, %c0_i32_72] : memref<16x32xf32, #tpu.memory_space<vmem>> -> memref<1x32xf32, #tpu.memory_space<vmem>>
      %148 = tpu.memref_slice %arg10[%c0_i32_70] : memref<1x!tpu.dma_semaphore, #tpu.memory_space<semaphore_mem>> -> memref<1x!tpu.dma_semaphore, #tpu.memory_space<semaphore_mem>>
      %149 = tpu.memref_squeeze %148 : memref<1x!tpu.dma_semaphore, #tpu.memory_space<semaphore_mem>> -> memref<!tpu.dma_semaphore, #tpu.memory_space<semaphore_mem>>
      tpu.enqueue_dma source(%146 : memref<1x32xf32, #tpu.memory_space<any>>) target(%147 : memref<1x32xf32, #tpu.memory_space<vmem>>) target_semaphore(%149 : memref<!tpu.dma_semaphore, #tpu.memory_space<semaphore_mem>>)
    }
    %c2_i32_0 = arith.constant 2 : i32
    %2 = tpu.iota {dimensions = array<i32: 0>} : vector<16x1xi32>
    %3 = vector.broadcast %0 : i32 to vector<16x1xi32>
    %4 = arith.addi %3, %2 : vector<16x1xi32>
    %c8_i32 = arith.constant 8 : i32
    %c0_i32_1 = arith.constant 0 : i32
    %5 = arith.cmpi eq, %c8_i32, %c0_i32_1 : i32
    %c1_i32_2 = arith.constant 1 : i32
    %6 = arith.select %5, %c1_i32_2, %c8_i32 : i32
    %7 = vector.broadcast %6 : i32 to vector<16x1xi32>
    %8 = arith.remsi %4, %7 : vector<16x1xi32>
    %c0_i32_3 = arith.constant 0 : i32
    %9 = vector.broadcast %c0_i32_3 : i32 to vector<16x1xi32>
    %10 = arith.cmpi ne, %8, %9 : vector<16x1xi32>
    %c0_i32_4 = arith.constant 0 : i32
    %11 = vector.broadcast %c0_i32_4 : i32 to vector<16x1xi32>
    %12 = arith.cmpi slt, %8, %11 : vector<16x1xi32>
    %c0_i32_5 = arith.constant 0 : i32
    %13 = arith.cmpi slt, %6, %c0_i32_5 : i32
    %14 = vector.broadcast %13 : i1 to vector<16x1xi1>
    %15 = vector.broadcast %14 : vector<16x1xi1> to vector<16x1xi1>
    %16 = arith.xori %12, %15 : vector<16x1xi1>
    %17 = arith.andi %16, %10 : vector<16x1xi1>
    %18 = vector.broadcast %6 : i32 to vector<16x1xi32>
    %19 = arith.addi %8, %18 : vector<16x1xi32>
    %20 = arith.select %17, %19, %8 : vector<16x1xi1>, vector<16x1xi32>
    %c0 = arith.constant 0 : index
    %c0_6 = arith.constant 0 : index
    %21 = vector.load %arg2[%c0, %c0_6] : memref<16x1xi32, #tpu.memory_space<vmem>>, vector<16x1xi32>
    %c16_i32_7 = arith.constant 16 : i32
    %22 = vector.broadcast %c16_i32_7 : i32 to vector<16x1xi32>
    %23 = arith.addi %21, %22 : vector<16x1xi32>
    %c0_8 = arith.constant 0 : index
    %c0_9 = arith.constant 0 : index
    %24 = vector.load %arg3[%c0_8, %c0_9] : memref<16x1xi32, #tpu.memory_space<vmem>>, vector<16x1xi32>
    %c18_i32 = arith.constant 18 : i32
    %25 = vector.broadcast %c18_i32 : i32 to vector<16x1xi32>
    %26 = arith.addi %24, %25 : vector<16x1xi32>
    %27 = tpu.iota {dimensions = array<i32: 1>} : vector<16x26xi32>
    %28 = vector.broadcast %20 : vector<16x1xi32> to vector<16x26xi32>
    %29 = arith.cmpi eq, %27, %28 : vector<16x26xi32>
    %30 = vector.broadcast %23 : vector<16x1xi32> to vector<16x26xi32>
    %31 = arith.cmpi eq, %27, %30 : vector<16x26xi32>
    %32 = arith.ori %29, %31 : vector<16x26xi1>
    %33 = vector.broadcast %26 : vector<16x1xi32> to vector<16x26xi32>
    %34 = arith.cmpi eq, %27, %33 : vector<16x26xi32>
    %35 = arith.ori %32, %34 : vector<16x26xi1>
    %36 = arith.extui %35 : vector<16x26xi1> to vector<16x26xi32>
    %37 = arith.sitofp %36 : vector<16x26xi32> to vector<16x26xf32>
    %c0_10 = arith.constant 0 : index
    %c0_11 = arith.constant 0 : index
    %38 = vector.load %arg5[%c0_10, %c0_11] : memref<26x32xf32, #tpu.memory_space<vmem>>, vector<26x32xf32>
    %cst = arith.constant dense<0.000000e+00> : vector<16x32xf32>
    %39 = tpu.matmul %37, %38, %cst {dimension_numbers = #tpu.dot_dimension_numbers<[1], [0], [0], [1], [0, 0, 1, 1], [], []>} : vector<16x26xf32>, vector<26x32xf32>, vector<16x32xf32> -> vector<16x32xf32>
    %c0_i32_12 = arith.constant 0 : i32
    %c2_i32_13 = arith.constant 2 : i32
    %40 = arith.addi %c0_i32_12, %c2_i32_13 : i32
    %c1_i32_14 = arith.constant 1 : i32
    scf.for %arg11 = %c0_i32_12 to %40 step %c1_i32_14  : i32 {
      %c0_i32_28 = arith.constant 0 : i32
      %c0_i32_29 = arith.constant 0 : i32
      %c0_i32_30 = arith.constant 0 : i32
      %66 = tpu.memref_slice %arg4[%c0_i32_29, %c0_i32_30] : memref<64x32xf32, #tpu.memory_space<any>> -> memref<1x32xf32, #tpu.memory_space<any>>
      %c0_i32_31 = arith.constant 0 : i32
      %c0_i32_32 = arith.constant 0 : i32
      %67 = tpu.memref_slice %arg9[%c0_i32_31, %c0_i32_32] : memref<16x32xf32, #tpu.memory_space<vmem>> -> memref<1x32xf32, #tpu.memory_space<vmem>>
      %68 = tpu.memref_slice %arg10[%c0_i32_28] : memref<1x!tpu.dma_semaphore, #tpu.memory_space<semaphore_mem>> -> memref<1x!tpu.dma_semaphore, #tpu.memory_space<semaphore_mem>>
      %69 = tpu.memref_squeeze %68 : memref<1x!tpu.dma_semaphore, #tpu.memory_space<semaphore_mem>> -> memref<!tpu.dma_semaphore, #tpu.memory_space<semaphore_mem>>
      tpu.wait_dma2 semaphore(%69 : memref<!tpu.dma_semaphore, #tpu.memory_space<semaphore_mem>>) src(%66 : memref<1x32xf32, #tpu.memory_space<any>>) dst(%67 : memref<1x32xf32, #tpu.memory_space<vmem>>)
      %c0_i32_33 = arith.constant 0 : i32
      %c0_i32_34 = arith.constant 0 : i32
      %c0_i32_35 = arith.constant 0 : i32
      %70 = tpu.memref_slice %arg4[%c0_i32_34, %c0_i32_35] : memref<64x32xf32, #tpu.memory_space<any>> -> memref<1x32xf32, #tpu.memory_space<any>>
      %c0_i32_36 = arith.constant 0 : i32
      %c0_i32_37 = arith.constant 0 : i32
      %71 = tpu.memref_slice %arg9[%c0_i32_36, %c0_i32_37] : memref<16x32xf32, #tpu.memory_space<vmem>> -> memref<1x32xf32, #tpu.memory_space<vmem>>
      %72 = tpu.memref_slice %arg10[%c0_i32_33] : memref<1x!tpu.dma_semaphore, #tpu.memory_space<semaphore_mem>> -> memref<1x!tpu.dma_semaphore, #tpu.memory_space<semaphore_mem>>
      %73 = tpu.memref_squeeze %72 : memref<1x!tpu.dma_semaphore, #tpu.memory_space<semaphore_mem>> -> memref<!tpu.dma_semaphore, #tpu.memory_space<semaphore_mem>>
      tpu.wait_dma2 semaphore(%73 : memref<!tpu.dma_semaphore, #tpu.memory_space<semaphore_mem>>) src(%70 : memref<1x32xf32, #tpu.memory_space<any>>) dst(%71 : memref<1x32xf32, #tpu.memory_space<vmem>>)
      %c0_i32_38 = arith.constant 0 : i32
      %c0_i32_39 = arith.constant 0 : i32
      %c0_i32_40 = arith.constant 0 : i32
      %74 = tpu.memref_slice %arg4[%c0_i32_39, %c0_i32_40] : memref<64x32xf32, #tpu.memory_space<any>> -> memref<1x32xf32, #tpu.memory_space<any>>
      %c0_i32_41 = arith.constant 0 : i32
      %c0_i32_42 = arith.constant 0 : i32
      %75 = tpu.memref_slice %arg9[%c0_i32_41, %c0_i32_42] : memref<16x32xf32, #tpu.memory_space<vmem>> -> memref<1x32xf32, #tpu.memory_space<vmem>>
      %76 = tpu.memref_slice %arg10[%c0_i32_38] : memref<1x!tpu.dma_semaphore, #tpu.memory_space<semaphore_mem>> -> memref<1x!tpu.dma_semaphore, #tpu.memory_space<semaphore_mem>>
      %77 = tpu.memref_squeeze %76 : memref<1x!tpu.dma_semaphore, #tpu.memory_space<semaphore_mem>> -> memref<!tpu.dma_semaphore, #tpu.memory_space<semaphore_mem>>
      tpu.wait_dma2 semaphore(%77 : memref<!tpu.dma_semaphore, #tpu.memory_space<semaphore_mem>>) src(%74 : memref<1x32xf32, #tpu.memory_space<any>>) dst(%75 : memref<1x32xf32, #tpu.memory_space<vmem>>)
      %c0_i32_43 = arith.constant 0 : i32
      %c0_i32_44 = arith.constant 0 : i32
      %c0_i32_45 = arith.constant 0 : i32
      %78 = tpu.memref_slice %arg4[%c0_i32_44, %c0_i32_45] : memref<64x32xf32, #tpu.memory_space<any>> -> memref<1x32xf32, #tpu.memory_space<any>>
      %c0_i32_46 = arith.constant 0 : i32
      %c0_i32_47 = arith.constant 0 : i32
      %79 = tpu.memref_slice %arg9[%c0_i32_46, %c0_i32_47] : memref<16x32xf32, #tpu.memory_space<vmem>> -> memref<1x32xf32, #tpu.memory_space<vmem>>
      %80 = tpu.memref_slice %arg10[%c0_i32_43] : memref<1x!tpu.dma_semaphore, #tpu.memory_space<semaphore_mem>> -> memref<1x!tpu.dma_semaphore, #tpu.memory_space<semaphore_mem>>
      %81 = tpu.memref_squeeze %80 : memref<1x!tpu.dma_semaphore, #tpu.memory_space<semaphore_mem>> -> memref<!tpu.dma_semaphore, #tpu.memory_space<semaphore_mem>>
      tpu.wait_dma2 semaphore(%81 : memref<!tpu.dma_semaphore, #tpu.memory_space<semaphore_mem>>) src(%78 : memref<1x32xf32, #tpu.memory_space<any>>) dst(%79 : memref<1x32xf32, #tpu.memory_space<vmem>>)
      %c0_i32_48 = arith.constant 0 : i32
      %c0_i32_49 = arith.constant 0 : i32
      %c0_i32_50 = arith.constant 0 : i32
      %82 = tpu.memref_slice %arg4[%c0_i32_49, %c0_i32_50] : memref<64x32xf32, #tpu.memory_space<any>> -> memref<1x32xf32, #tpu.memory_space<any>>
      %c0_i32_51 = arith.constant 0 : i32
      %c0_i32_52 = arith.constant 0 : i32
      %83 = tpu.memref_slice %arg9[%c0_i32_51, %c0_i32_52] : memref<16x32xf32, #tpu.memory_space<vmem>> -> memref<1x32xf32, #tpu.memory_space<vmem>>
      %84 = tpu.memref_slice %arg10[%c0_i32_48] : memref<1x!tpu.dma_semaphore, #tpu.memory_space<semaphore_mem>> -> memref<1x!tpu.dma_semaphore, #tpu.memory_space<semaphore_mem>>
      %85 = tpu.memref_squeeze %84 : memref<1x!tpu.dma_semaphore, #tpu.memory_space<semaphore_mem>> -> memref<!tpu.dma_semaphore, #tpu.memory_space<semaphore_mem>>
      tpu.wait_dma2 semaphore(%85 : memref<!tpu.dma_semaphore, #tpu.memory_space<semaphore_mem>>) src(%82 : memref<1x32xf32, #tpu.memory_space<any>>) dst(%83 : memref<1x32xf32, #tpu.memory_space<vmem>>)
      %c0_i32_53 = arith.constant 0 : i32
      %c0_i32_54 = arith.constant 0 : i32
      %c0_i32_55 = arith.constant 0 : i32
      %86 = tpu.memref_slice %arg4[%c0_i32_54, %c0_i32_55] : memref<64x32xf32, #tpu.memory_space<any>> -> memref<1x32xf32, #tpu.memory_space<any>>
      %c0_i32_56 = arith.constant 0 : i32
      %c0_i32_57 = arith.constant 0 : i32
      %87 = tpu.memref_slice %arg9[%c0_i32_56, %c0_i32_57] : memref<16x32xf32, #tpu.memory_space<vmem>> -> memref<1x32xf32, #tpu.memory_space<vmem>>
      %88 = tpu.memref_slice %arg10[%c0_i32_53] : memref<1x!tpu.dma_semaphore, #tpu.memory_space<semaphore_mem>> -> memref<1x!tpu.dma_semaphore, #tpu.memory_space<semaphore_mem>>
      %89 = tpu.memref_squeeze %88 : memref<1x!tpu.dma_semaphore, #tpu.memory_space<semaphore_mem>> -> memref<!tpu.dma_semaphore, #tpu.memory_space<semaphore_mem>>
      tpu.wait_dma2 semaphore(%89 : memref<!tpu.dma_semaphore, #tpu.memory_space<semaphore_mem>>) src(%86 : memref<1x32xf32, #tpu.memory_space<any>>) dst(%87 : memref<1x32xf32, #tpu.memory_space<vmem>>)
      %c0_i32_58 = arith.constant 0 : i32
      %c0_i32_59 = arith.constant 0 : i32
      %c0_i32_60 = arith.constant 0 : i32
      %90 = tpu.memref_slice %arg4[%c0_i32_59, %c0_i32_60] : memref<64x32xf32, #tpu.memory_space<any>> -> memref<1x32xf32, #tpu.memory_space<any>>
      %c0_i32_61 = arith.constant 0 : i32
      %c0_i32_62 = arith.constant 0 : i32
      %91 = tpu.memref_slice %arg9[%c0_i32_61, %c0_i32_62] : memref<16x32xf32, #tpu.memory_space<vmem>> -> memref<1x32xf32, #tpu.memory_space<vmem>>
      %92 = tpu.memref_slice %arg10[%c0_i32_58] : memref<1x!tpu.dma_semaphore, #tpu.memory_space<semaphore_mem>> -> memref<1x!tpu.dma_semaphore, #tpu.memory_space<semaphore_mem>>
      %93 = tpu.memref_squeeze %92 : memref<1x!tpu.dma_semaphore, #tpu.memory_space<semaphore_mem>> -> memref<!tpu.dma_semaphore, #tpu.memory_space<semaphore_mem>>
      tpu.wait_dma2 semaphore(%93 : memref<!tpu.dma_semaphore, #tpu.memory_space<semaphore_mem>>) src(%90 : memref<1x32xf32, #tpu.memory_space<any>>) dst(%91 : memref<1x32xf32, #tpu.memory_space<vmem>>)
      %c0_i32_63 = arith.constant 0 : i32
      %c0_i32_64 = arith.constant 0 : i32
      %c0_i32_65 = arith.constant 0 : i32
      %94 = tpu.memref_slice %arg4[%c0_i32_64, %c0_i32_65] : memref<64x32xf32, #tpu.memory_space<any>> -> memref<1x32xf32, #tpu.memory_space<any>>
      %c0_i32_66 = arith.constant 0 : i32
      %c0_i32_67 = arith.constant 0 : i32
      %95 = tpu.memref_slice %arg9[%c0_i32_66, %c0_i32_67] : memref<16x32xf32, #tpu.memory_space<vmem>> -> memref<1x32xf32, #tpu.memory_space<vmem>>
      %96 = tpu.memref_slice %arg10[%c0_i32_63] : memref<1x!tpu.dma_semaphore, #tpu.memory_space<semaphore_mem>> -> memref<1x!tpu.dma_semaphore, #tpu.memory_space<semaphore_mem>>
      %97 = tpu.memref_squeeze %96 : memref<1x!tpu.dma_semaphore, #tpu.memory_space<semaphore_mem>> -> memref<!tpu.dma_semaphore, #tpu.memory_space<semaphore_mem>>
      tpu.wait_dma2 semaphore(%97 : memref<!tpu.dma_semaphore, #tpu.memory_space<semaphore_mem>>) src(%94 : memref<1x32xf32, #tpu.memory_space<any>>) dst(%95 : memref<1x32xf32, #tpu.memory_space<vmem>>)
    }
    %c0_15 = arith.constant 0 : index
    %c0_16 = arith.constant 0 : index
    %41 = vector.load %arg9[%c0_15, %c0_16] : memref<16x32xf32, #tpu.memory_space<vmem>>, vector<16x32xf32>
    %42 = arith.addf %41, %39 : vector<16x32xf32>
    %cst_17 = arith.constant dense<0.000000e+00> : vector<16xf32>
    %43 = vector.multi_reduction <add>, %42, %cst_17 [1] : vector<16x32xf32> to vector<16xf32>
    %44 = vector.shape_cast %43 : vector<16xf32> to vector<16x1xf32>
    %cst_18 = arith.constant 3.200000e+01 : f32
    %45 = vector.broadcast %cst_18 : f32 to vector<16x1xf32>
    %46 = arith.divf %44, %45 : vector<16x1xf32>
    %47 = vector.broadcast %46 : vector<16x1xf32> to vector<16x32xf32>
    %48 = arith.subf %42, %47 : vector<16x32xf32>
    %49 = arith.mulf %48, %48 : vector<16x32xf32>
    %cst_19 = arith.constant dense<0.000000e+00> : vector<16xf32>
    %50 = vector.multi_reduction <add>, %49, %cst_19 [1] : vector<16x32xf32> to vector<16xf32>
    %51 = vector.shape_cast %50 : vector<16xf32> to vector<16x1xf32>
    %cst_20 = arith.constant 3.200000e+01 : f32
    %52 = vector.broadcast %cst_20 : f32 to vector<16x1xf32>
    %53 = arith.divf %51, %52 : vector<16x1xf32>
    %cst_21 = arith.constant 9.99999996E-13 : f32
    %54 = vector.broadcast %cst_21 : f32 to vector<16x1xf32>
    %55 = arith.addf %53, %54 : vector<16x1xf32>
    %56 = math.rsqrt %55 : vector<16x1xf32>
    %57 = vector.broadcast %56 : vector<16x1xf32> to vector<16x32xf32>
    %58 = arith.mulf %48, %57 : vector<16x32xf32>
    %c0_22 = arith.constant 0 : index
    %c0_23 = arith.constant 0 : index
    %59 = vector.load %arg6[%c0_22, %c0_23] : memref<1x32xf32, #tpu.memory_space<vmem>>, vector<1x32xf32>
    %60 = vector.broadcast %59 : vector<1x32xf32> to vector<16x32xf32>
    %61 = arith.mulf %60, %58 : vector<16x32xf32>
    %c0_24 = arith.constant 0 : index
    %c0_25 = arith.constant 0 : index
    %62 = vector.load %arg7[%c0_24, %c0_25] : memref<1x32xf32, #tpu.memory_space<vmem>>, vector<1x32xf32>
    %63 = vector.broadcast %62 : vector<1x32xf32> to vector<16x32xf32>
    %64 = arith.addf %61, %63 : vector<16x32xf32>
    %c0_26 = arith.constant 0 : index
    %c0_27 = arith.constant 0 : index
    %65 = vector.load %arg8[%c0_26, %c0_27] : memref<16x32xf32, #tpu.memory_space<vmem>>, vector<16x32xf32>
    tpu.vector_store %arg8[%c0_26, %c0_27], %64 {strides = array<i32>} : memref<16x32xf32, #tpu.memory_space<vmem>>, vector<16x32xf32>,
    return
  }
  func.func @transform_0(%arg0: i32, %arg1: memref<16xi32, #tpu.memory_space<smem>>) -> (i32, i32) {
    %c0_i32 = arith.constant 0 : i32
    %c0_i32_0 = arith.constant 0 : i32
    return %arg0, %c0_i32 : i32, i32
  }
  func.func @transform_1(%arg0: i32, %arg1: memref<16xi32, #tpu.memory_space<smem>>) -> (i32, i32) {
    %c0_i32 = arith.constant 0 : i32
    %c0_i32_0 = arith.constant 0 : i32
    return %arg0, %c0_i32 : i32, i32
  }
  func.func @transform_3(%arg0: i32, %arg1: memref<16xi32, #tpu.memory_space<smem>>) -> (i32, i32) {
    %c0_i32 = arith.constant 0 : i32
    %c0_i32_0 = arith.constant 0 : i32
    %c0_i32_1 = arith.constant 0 : i32
    return %c0_i32, %c0_i32_0 : i32, i32
  }
  func.func @transform_4(%arg0: i32, %arg1: memref<16xi32, #tpu.memory_space<smem>>) -> (i32, i32) {
    %c0_i32 = arith.constant 0 : i32
    %c0_i32_0 = arith.constant 0 : i32
    %c0_i32_1 = arith.constant 0 : i32
    return %c0_i32, %c0_i32_0 : i32, i32
  }
  func.func @transform_5(%arg0: i32, %arg1: memref<16xi32, #tpu.memory_space<smem>>) -> (i32, i32) {
    %c0_i32 = arith.constant 0 : i32
    %c0_i32_0 = arith.constant 0 : i32
    %c0_i32_1 = arith.constant 0 : i32
    return %c0_i32, %c0_i32_0 : i32, i32
  }
  func.func @transform_6(%arg0: i32, %arg1: memref<16xi32, #tpu.memory_space<smem>>) -> (i32, i32) {
    %c0_i32 = arith.constant 0 : i32
    %c0_i32_0 = arith.constant 0 : i32
    return %arg0, %c0_i32 : i32, i32
  }
}

</mosaic_0001>

<llo_original>
// kernel: tpu_custom_call.1
$region0: #{tpu_custom_call.1}
  #allocation0 [shape = 'u32[]', space=smem, size = 0x4, offset = 0x4, fixed_abs, tag = 'smem constant byte address 0x4 - core index']
  #allocation1 [shape = 'u32[72,128]{1,0:T(1,128)}', space=vmem, size = 0x9000, scoped, tag = 'internal scratch']
  #allocation2 [shape = 'f32[16,32]{1,0:T(8,128)}', space=vmem, size = 0x2000, scoped, tag = 'scratch operand']
  #allocation3 [shape = 's32[1]{0}', space=sflag, size = 0x4, scoped, tag = 'scratch operand']
  #allocation4 [shape = 's32[1]{0}', space=sflag, size = 0x4, scoped, tag = 'scoped memory for tpu_custom_call.1']
  #allocation5 [shape = 'u8[512]{0}', space=smem, size = 0x200, scoped, tag = 'prefetched SMEM operand 0']
  #allocation8 [shape = 's32[]', space=sflag, size = 0x4, offset = 0, fixed_abs, tag = 'sflag constant byte address 0x0 - dummy sync flag']
  #allocation9 [shape = 's32[]', space=sflag, size = 0x4, offset = 0, fixed_abs, tag = 'sflag constant byte address 0x0 - dummy sync flag']
  #allocation10 [shape = 's32[]', space=sflag, size = 0x4, offset = 0, fixed_abs, tag = 'sflag constant byte address 0x0 - dummy sync flag']
  #allocation11 [shape = 's32[]', space=sflag, size = 0x4, offset = 0, fixed_abs, tag = 'sflag constant byte address 0x0 - dummy sync flag']
  #allocation12 [shape = 's32[]', space=sflag, size = 0x4, offset = 0, fixed_abs, tag = 'sflag constant byte address 0x0 - dummy sync flag']
  #allocation13 [shape = 's32[]', space=sflag, size = 0x4, offset = 0, fixed_abs, tag = 'sflag constant byte address 0x0 - dummy sync flag']
  #allocation14 [shape = 's32[]', space=sflag, size = 0x4, offset = 0, fixed_abs, tag = 'sflag constant byte address 0x0 - dummy sync flag']
  #allocation15 [shape = 's32[]', space=sflag, size = 0x4, offset = 0, fixed_abs, tag = 'sflag constant byte address 0x0 - dummy sync flag']
  %s0 = inlined_call_operand.vmem [shape: s32[16], index: 0, kind: input, shape index: {}]
  %s1 = inlined_call_operand.vmem [shape: s32[16,1], index: 1, kind: input, shape index: {}]
  %s2 = inlined_call_operand.vmem [shape: s32[16,1], index: 2, kind: input, shape index: {}]
  %s3 = inlined_call_operand.vmem [shape: f32[64,32], index: 3, kind: input, shape index: {}]
  %s4 = inlined_call_operand.vmem [shape: f32[26,32], index: 4, kind: input, shape index: {}]
  %s5 = inlined_call_operand.vmem [shape: f32[1,32], index: 5, kind: input, shape index: {}]
  %s6 = inlined_call_operand.vmem [shape: f32[1,32], index: 6, kind: input, shape index: {}]
  %s7 = inlined_call_operand.hbm [shape: f32[16,32], index: 7, kind: output, shape index: {}]
  %s8 = sld [smem:[#allocation0]]
  $region284: #{tpu_custom_call.1} parent=0
    _
  %s10 = ssub.s32 1, %s8
  %s11 = scalar_select 0, %s10, %s8
  %s13 = sshll.u32 %s0, 4
  %s14 = int_to_ptr.vmem [resolvable:$true] %s13
  %16 = dma.vmem_to_smem %s14, 16, [#allocation5], [#allocation4]
  %18 = dma.done [#allocation4], 16
  %19 = sfence
  $region1: #{tpu_custom_call.1} parent=0
    #allocation6 [shape = 'u8[8192]{0}', space=vmem, size = 0x2000, scoped, tag = 'output window, operand 0, single buffered']
    #allocation7 [shape = 's32[1]{0}', space=sflag, size = 0x4, scoped, tag = 'scoped memory for tpu_custom_call.1']
    %20 = vsyncpa [#allocation7], 0
    // Predicated region
    $region2: #{tpu_custom_call.1} parent=1 // pred_check
      _
    $region3: #{tpu_custom_call.1} parent=1 // pred_check_branch
      %22 = sbr.rel (0) target = $region5
    $region4: #{tpu_custom_call.1} parent=1 // pred_region
      _
    $region5: #{tpu_custom_call.1} parent=1 // pred_fallthru
      _
    // Predicated region
    $region6: #{tpu_custom_call.1} parent=1 // pred_check
      _
    $region7: #{tpu_custom_call.1} parent=1 // pred_check_branch
      %24 = sbr.rel (0) target = $region9
    $region8: #{tpu_custom_call.1} parent=1 // pred_region
      _
    $region9: #{tpu_custom_call.1} parent=1 // pred_fallthru
      _
    // Predicated region
    $region10: #{tpu_custom_call.1} parent=1 // pred_check
      _
    $region11: #{tpu_custom_call.1} parent=1 // pred_check_branch
      %26 = sbr.rel (0) target = $region13
    $region12: #{tpu_custom_call.1} parent=1 // pred_region
      _
    $region13: #{tpu_custom_call.1} parent=1 // pred_fallthru
      _
    // Predicated region
    $region14: #{tpu_custom_call.1} parent=1 // pred_check
      _
    $region15: #{tpu_custom_call.1} parent=1 // pred_check_branch
      %28 = sbr.rel (0) target = $region17
    $region16: #{tpu_custom_call.1} parent=1 // pred_region
      _
    $region17: #{tpu_custom_call.1} parent=1 // pred_fallthru
      _
    // Predicated region
    $region18: #{tpu_custom_call.1} parent=1 // pred_check
      _
    $region19: #{tpu_custom_call.1} parent=1 // pred_check_branch
      %30 = sbr.rel (0) target = $region21
    $region20: #{tpu_custom_call.1} parent=1 // pred_region
      _
    $region21: #{tpu_custom_call.1} parent=1 // pred_fallthru
      _
    %s31 = smul.u32 0, 16
    loop: start=0, step=1, limit=2
    $region22: #{tpu_custom_call.1} parent=1 // loop_pre_header
      _
    $region23: #{tpu_custom_call.1} parent=1 // loop_header
      %s33 = sphi 0, %s37
      %p34 = scmp.ge.s32.totalorder %s33, 2
    $region24: #{tpu_custom_call.1} parent=1 // loop_header_branch
      %36 = sbr.rel (%p34) target = $region28
    $region25: #{tpu_custom_call.1} parent=1 // loop_body
      %s38 = smul.u32 %s33, 8
      %s39 = sadd.s32 %s31, %s38
      %s40 = sld [smem:[#allocation5 + %s39]]
      %p41 = scmp.gt.s32.totalorder %s40, 0
      %s42 = scalar_select %p41, %s40, 0
      %p43 = scmp.lt.s32.totalorder %s42, 63
      %s44 = scalar_select %p43, %s42, 63
      %s45 = scalar_lea.vmem %s3, %s44
      %s46 = scalar_lea.vmem [#allocation2], %s38
      // Predicated region
      $region29: #{tpu_custom_call.1} parent=25 // pred_check
        _
      $region30: #{tpu_custom_call.1} parent=25 // pred_check_branch
        %48 = sbr.rel target = $region32
      $region31: #{tpu_custom_call.1} parent=25 // pred_region
        // Predicated region
        $region44: #{tpu_custom_call.1} parent=31 // pred_check
          _
        $region45: #{tpu_custom_call.1} parent=31 // pred_check_branch
          %64 = sbr.rel (0) target = $region47
        $region46: #{tpu_custom_call.1} parent=31 // pred_region
          %s66 = ssub.s32 2, 1
          loop: start=0, step=1, limit=1
          $region48: #{tpu_custom_call.1} parent=46 // loop_pre_header
            _
          $region49: #{tpu_custom_call.1} parent=46 // loop_header
            %s68 = sphi 0, %s72
            %p69 = scmp.ge.s32.totalorder %s68, 1
            %s73 = sphi %s45, %s45
            %s74 = sphi %s46, %s46
          $region50: #{tpu_custom_call.1} parent=46 // loop_header_branch
            %71 = sbr.rel (%p69) target = $region54
          $region51: #{tpu_custom_call.1} parent=46 // loop_body
            %v75 = vld [vmem:[%s73] sm:%s66]
            %76 = vst [vmem:[%s74] sm:%s66] %v75
          $region52: #{tpu_custom_call.1} parent=46 // loop_footer
            %s72 = sadd.s32 1, %s68
          $region53: #{tpu_custom_call.1} parent=46 // loop_footer_branch
            %67 = sbr.rel target = $region49
          $region54: #{tpu_custom_call.1} parent=46 // loop_exit
            _
        $region47: #{tpu_custom_call.1} parent=31 // pred_fallthru
          _
      $region32: #{tpu_custom_call.1} parent=25 // pred_fallthru
        _
      // Predicated region
      $region33: #{tpu_custom_call.1} parent=25 // pred_check
        _
      $region34: #{tpu_custom_call.1} parent=25 // pred_check_branch
        %50 = sbr.rel (0) target = $region36
      $region35: #{tpu_custom_call.1} parent=25 // pred_region
        %s52 = ssub.s32 2, 1
        loop: start=0, step=1, limit=1
        $region37: #{tpu_custom_call.1} parent=35 // loop_pre_header
          _
        $region38: #{tpu_custom_call.1} parent=35 // loop_header
          %s54 = sphi 0, %s58
          %p55 = scmp.ge.s32.totalorder %s54, 1
          %s59 = sphi %s45, %s45
          %s60 = sphi %s46, %s46
        $region39: #{tpu_custom_call.1} parent=35 // loop_header_branch
          %57 = sbr.rel (%p55) target = $region43
        $region40: #{tpu_custom_call.1} parent=35 // loop_body
          %v61 = vld [vmem:[%s59] sm:%s52]
          %62 = vst [vmem:[%s60] sm:%s52] %v61
        $region41: #{tpu_custom_call.1} parent=35 // loop_footer
          %s58 = sadd.s32 1, %s54
        $region42: #{tpu_custom_call.1} parent=35 // loop_footer_branch
          %53 = sbr.rel target = $region38
        $region43: #{tpu_custom_call.1} parent=35 // loop_exit
          _
      $region36: #{tpu_custom_call.1} parent=25 // pred_fallthru
        _
      // Predicated region
      $region55: #{tpu_custom_call.1} parent=25 // pred_check
        _
      $region56: #{tpu_custom_call.1} parent=25 // pred_check_branch
        %79 = sbr.rel (0) target = $region58
      $region57: #{tpu_custom_call.1} parent=25 // pred_region
        %80 = vsyncadd [#allocation3], 16
      $region58: #{tpu_custom_call.1} parent=25 // pred_fallthru
        _
      %s81 = sadd.s32 %s38, 1
      %s82 = sadd.s32 %s31, %s81
      %s83 = sld [smem:[#allocation5 + %s82]]
      %p84 = scmp.gt.s32.totalorder %s83, 0
      %s85 = scalar_select %p84, %s83, 0
      %p86 = scmp.lt.s32.totalorder %s85, 63
      %s87 = scalar_select %p86, %s85, 63
      %s88 = scalar_lea.vmem %s3, %s87
      %s89 = scalar_lea.vmem [#allocation2], %s81
      // Predicated region
      $region59: #{tpu_custom_call.1} parent=25 // pred_check
        _
      $region60: #{tpu_custom_call.1} parent=25 // pred_check_branch
        %91 = sbr.rel target = $region62
      $region61: #{tpu_custom_call.1} parent=25 // pred_region
        // Predicated region
        $region74: #{tpu_custom_call.1} parent=61 // pred_check
          _
        $region75: #{tpu_custom_call.1} parent=61 // pred_check_branch
          %107 = sbr.rel (0) target = $region77
        $region76: #{tpu_custom_call.1} parent=61 // pred_region
          %s109 = ssub.s32 2, 1
          loop: start=0, step=1, limit=1
          $region78: #{tpu_custom_call.1} parent=76 // loop_pre_header
            _
          $region79: #{tpu_custom_call.1} parent=76 // loop_header
            %s111 = sphi 0, %s115
            %p112 = scmp.ge.s32.totalorder %s111, 1
            %s116 = sphi %s88, %s88
            %s117 = sphi %s89, %s89
          $region80: #{tpu_custom_call.1} parent=76 // loop_header_branch
            %114 = sbr.rel (%p112) target = $region84
          $region81: #{tpu_custom_call.1} parent=76 // loop_body
            %v118 = vld [vmem:[%s116] sm:%s109]
            %119 = vst [vmem:[%s117] sm:%s109] %v118
          $region82: #{tpu_custom_call.1} parent=76 // loop_footer
            %s115 = sadd.s32 1, %s111
          $region83: #{tpu_custom_call.1} parent=76 // loop_footer_branch
            %110 = sbr.rel target = $region79
          $region84: #{tpu_custom_call.1} parent=76 // loop_exit
            _
        $region77: #{tpu_custom_call.1} parent=61 // pred_fallthru
          _
      $region62: #{tpu_custom_call.1} parent=25 // pred_fallthru
        _
      // Predicated region
      $region63: #{tpu_custom_call.1} parent=25 // pred_check
        _
      $region64: #{tpu_custom_call.1} parent=25 // pred_check_branch
        %93 = sbr.rel (0) target = $region66
      $region65: #{tpu_custom_call.1} parent=25 // pred_region
        %s95 = ssub.s32 2, 1
        loop: start=0, step=1, limit=1
        $region67: #{tpu_custom_call.1} parent=65 // loop_pre_header
          _
        $region68: #{tpu_custom_call.1} parent=65 // loop_header
          %s97 = sphi 0, %s101
          %p98 = scmp.ge.s32.totalorder %s97, 1
          %s102 = sphi %s88, %s88
          %s103 = sphi %s89, %s89
        $region69: #{tpu_custom_call.1} parent=65 // loop_header_branch
          %100 = sbr.rel (%p98) target = $region73
        $region70: #{tpu_custom_call.1} parent=65 // loop_body
          %v104 = vld [vmem:[%s102] sm:%s95]
          %105 = vst [vmem:[%s103] sm:%s95] %v104
        $region71: #{tpu_custom_call.1} parent=65 // loop_footer
          %s101 = sadd.s32 1, %s97
        $region72: #{tpu_custom_call.1} parent=65 // loop_footer_branch
          %96 = sbr.rel target = $region68
        $region73: #{tpu_custom_call.1} parent=65 // loop_exit
          _
      $region66: #{tpu_custom_call.1} parent=25 // pred_fallthru
        _
      // Predicated region
      $region85: #{tpu_custom_call.1} parent=25 // pred_check
        _
      $region86: #{tpu_custom_call.1} parent=25 // pred_check_branch
        %122 = sbr.rel (0) target = $region88
      $region87: #{tpu_custom_call.1} parent=25 // pred_region
        %123 = vsyncadd [#allocation3], 16
      $region88: #{tpu_custom_call.1} parent=25 // pred_fallthru
        _
      %s124 = sadd.s32 %s38, 2
      %s125 = sadd.s32 %s31, %s124
      %s126 = sld [smem:[#allocation5 + %s125]]
      %p127 = scmp.gt.s32.totalorder %s126, 0
      %s128 = scalar_select %p127, %s126, 0
      %p129 = scmp.lt.s32.totalorder %s128, 63
      %s130 = scalar_select %p129, %s128, 63
      %s131 = scalar_lea.vmem %s3, %s130
      %s132 = scalar_lea.vmem [#allocation2], %s124
      // Predicated region
      $region89: #{tpu_custom_call.1} parent=25 // pred_check
        _
      $region90: #{tpu_custom_call.1} parent=25 // pred_check_branch
        %134 = sbr.rel target = $region92
      $region91: #{tpu_custom_call.1} parent=25 // pred_region
        // Predicated region
        $region104: #{tpu_custom_call.1} parent=91 // pred_check
          _
        $region105: #{tpu_custom_call.1} parent=91 // pred_check_branch
          %150 = sbr.rel (0) target = $region107
        $region106: #{tpu_custom_call.1} parent=91 // pred_region
          %s152 = ssub.s32 2, 1
          loop: start=0, step=1, limit=1
          $region108: #{tpu_custom_call.1} parent=106 // loop_pre_header
            _
          $region109: #{tpu_custom_call.1} parent=106 // loop_header
            %s154 = sphi 0, %s158
            %p155 = scmp.ge.s32.totalorder %s154, 1
            %s159 = sphi %s131, %s131
            %s160 = sphi %s132, %s132
          $region110: #{tpu_custom_call.1} parent=106 // loop_header_branch
            %157 = sbr.rel (%p155) target = $region114
          $region111: #{tpu_custom_call.1} parent=106 // loop_body
            %v161 = vld [vmem:[%s159] sm:%s152]
            %162 = vst [vmem:[%s160] sm:%s152] %v161
          $region112: #{tpu_custom_call.1} parent=106 // loop_footer
            %s158 = sadd.s32 1, %s154
          $region113: #{tpu_custom_call.1} parent=106 // loop_footer_branch
            %153 = sbr.rel target = $region109
          $region114: #{tpu_custom_call.1} parent=106 // loop_exit
            _
        $region107: #{tpu_custom_call.1} parent=91 // pred_fallthru
          _
      $region92: #{tpu_custom_call.1} parent=25 // pred_fallthru
        _
      // Predicated region
      $region93: #{tpu_custom_call.1} parent=25 // pred_check
        _
      $region94: #{tpu_custom_call.1} parent=25 // pred_check_branch
        %136 = sbr.rel (0) target = $region96
      $region95: #{tpu_custom_call.1} parent=25 // pred_region
        %s138 = ssub.s32 2, 1
        loop: start=0, step=1, limit=1
        $region97: #{tpu_custom_call.1} parent=95 // loop_pre_header
          _
        $region98: #{tpu_custom_call.1} parent=95 // loop_header
          %s140 = sphi 0, %s144
          %p141 = scmp.ge.s32.totalorder %s140, 1
          %s145 = sphi %s131, %s131
          %s146 = sphi %s132, %s132
        $region99: #{tpu_custom_call.1} parent=95 // loop_header_branch
          %143 = sbr.rel (%p141) target = $region103
        $region100: #{tpu_custom_call.1} parent=95 // loop_body
          %v147 = vld [vmem:[%s145] sm:%s138]
          %148 = vst [vmem:[%s146] sm:%s138] %v147
        $region101: #{tpu_custom_call.1} parent=95 // loop_footer
          %s144 = sadd.s32 1, %s140
        $region102: #{tpu_custom_call.1} parent=95 // loop_footer_branch
          %139 = sbr.rel target = $region98
        $region103: #{tpu_custom_call.1} parent=95 // loop_exit
          _
      $region96: #{tpu_custom_call.1} parent=25 // pred_fallthru
        _
      // Predicated region
      $region115: #{tpu_custom_call.1} parent=25 // pred_check
        _
      $region116: #{tpu_custom_call.1} parent=25 // pred_check_branch
        %165 = sbr.rel (0) target = $region118
      $region117: #{tpu_custom_call.1} parent=25 // pred_region
        %166 = vsyncadd [#allocation3], 16
      $region118: #{tpu_custom_call.1} parent=25 // pred_fallthru
        _
      %s167 = sadd.s32 %s38, 3
      %s168 = sadd.s32 %s31, %s167
      %s169 = sld [smem:[#allocation5 + %s168]]
      %p170 = scmp.gt.s32.totalorder %s169, 0
      %s171 = scalar_select %p170, %s169, 0
      %p172 = scmp.lt.s32.totalorder %s171, 63
      %s173 = scalar_select %p172, %s171, 63
      %s174 = scalar_lea.vmem %s3, %s173
      %s175 = scalar_lea.vmem [#allocation2], %s167
      // Predicated region
      $region119: #{tpu_custom_call.1} parent=25 // pred_check
        _
      $region120: #{tpu_custom_call.1} parent=25 // pred_check_branch
        %177 = sbr.rel target = $region122
      $region121: #{tpu_custom_call.1} parent=25 // pred_region
        // Predicated region
        $region134: #{tpu_custom_call.1} parent=121 // pred_check
          _
        $region135: #{tpu_custom_call.1} parent=121 // pred_check_branch
          %193 = sbr.rel (0) target = $region137
        $region136: #{tpu_custom_call.1} parent=121 // pred_region
          %s195 = ssub.s32 2, 1
          loop: start=0, step=1, limit=1
          $region138: #{tpu_custom_call.1} parent=136 // loop_pre_header
            _
          $region139: #{tpu_custom_call.1} parent=136 // loop_header
            %s197 = sphi 0, %s201
            %p198 = scmp.ge.s32.totalorder %s197, 1
            %s202 = sphi %s174, %s174
            %s203 = sphi %s175, %s175
          $region140: #{tpu_custom_call.1} parent=136 // loop_header_branch
            %200 = sbr.rel (%p198) target = $region144
          $region141: #{tpu_custom_call.1} parent=136 // loop_body
            %v204 = vld [vmem:[%s202] sm:%s195]
            %205 = vst [vmem:[%s203] sm:%s195] %v204
          $region142: #{tpu_custom_call.1} parent=136 // loop_footer
            %s201 = sadd.s32 1, %s197
          $region143: #{tpu_custom_call.1} parent=136 // loop_footer_branch
            %196 = sbr.rel target = $region139
          $region144: #{tpu_custom_call.1} parent=136 // loop_exit
            _
        $region137: #{tpu_custom_call.1} parent=121 // pred_fallthru
          _
      $region122: #{tpu_custom_call.1} parent=25 // pred_fallthru
        _
      // Predicated region
      $region123: #{tpu_custom_call.1} parent=25 // pred_check
        _
      $region124: #{tpu_custom_call.1} parent=25 // pred_check_branch
        %179 = sbr.rel (0) target = $region126
      $region125: #{tpu_custom_call.1} parent=25 // pred_region
        %s181 = ssub.s32 2, 1
        loop: start=0, step=1, limit=1
        $region127: #{tpu_custom_call.1} parent=125 // loop_pre_header
          _
        $region128: #{tpu_custom_call.1} parent=125 // loop_header
          %s183 = sphi 0, %s187
          %p184 = scmp.ge.s32.totalorder %s183, 1
          %s188 = sphi %s174, %s174
          %s189 = sphi %s175, %s175
        $region129: #{tpu_custom_call.1} parent=125 // loop_header_branch
          %186 = sbr.rel (%p184) target = $region133
        $region130: #{tpu_custom_call.1} parent=125 // loop_body
          %v190 = vld [vmem:[%s188] sm:%s181]
          %191 = vst [vmem:[%s189] sm:%s181] %v190
        $region131: #{tpu_custom_call.1} parent=125 // loop_footer
          %s187 = sadd.s32 1, %s183
        $region132: #{tpu_custom_call.1} parent=125 // loop_footer_branch
          %182 = sbr.rel target = $region128
        $region133: #{tpu_custom_call.1} parent=125 // loop_exit
          _
      $region126: #{tpu_custom_call.1} parent=25 // pred_fallthru
        _
      // Predicated region
      $region145: #{tpu_custom_call.1} parent=25 // pred_check
        _
      $region146: #{tpu_custom_call.1} parent=25 // pred_check_branch
        %208 = sbr.rel (0) target = $region148
      $region147: #{tpu_custom_call.1} parent=25 // pred_region
        %209 = vsyncadd [#allocation3], 16
      $region148: #{tpu_custom_call.1} parent=25 // pred_fallthru
        _
      %s210 = sadd.s32 %s38, 4
      %s211 = sadd.s32 %s31, %s210
      %s212 = sld [smem:[#allocation5 + %s211]]
      %p213 = scmp.gt.s32.totalorder %s212, 0
      %s214 = scalar_select %p213, %s212, 0
      %p215 = scmp.lt.s32.totalorder %s214, 63
      %s216 = scalar_select %p215, %s214, 63
      %s217 = scalar_lea.vmem %s3, %s216
      %s218 = scalar_lea.vmem [#allocation2], %s210
      // Predicated region
      $region149: #{tpu_custom_call.1} parent=25 // pred_check
        _
      $region150: #{tpu_custom_call.1} parent=25 // pred_check_branch
        %220 = sbr.rel target = $region152
      $region151: #{tpu_custom_call.1} parent=25 // pred_region
        // Predicated region
        $region164: #{tpu_custom_call.1} parent=151 // pred_check
          _
        $region165: #{tpu_custom_call.1} parent=151 // pred_check_branch
          %236 = sbr.rel (0) target = $region167
        $region166: #{tpu_custom_call.1} parent=151 // pred_region
          %s238 = ssub.s32 2, 1
          loop: start=0, step=1, limit=1
          $region168: #{tpu_custom_call.1} parent=166 // loop_pre_header
            _
          $region169: #{tpu_custom_call.1} parent=166 // loop_header
            %s240 = sphi 0, %s244
            %p241 = scmp.ge.s32.totalorder %s240, 1
            %s245 = sphi %s217, %s217
            %s246 = sphi %s218, %s218
          $region170: #{tpu_custom_call.1} parent=166 // loop_header_branch
            %243 = sbr.rel (%p241) target = $region174
          $region171: #{tpu_custom_call.1} parent=166 // loop_body
            %v247 = vld [vmem:[%s245] sm:%s238]
            %248 = vst [vmem:[%s246] sm:%s238] %v247
          $region172: #{tpu_custom_call.1} parent=166 // loop_footer
            %s244 = sadd.s32 1, %s240
          $region173: #{tpu_custom_call.1} parent=166 // loop_footer_branch
            %239 = sbr.rel target = $region169
          $region174: #{tpu_custom_call.1} parent=166 // loop_exit
            _
        $region167: #{tpu_custom_call.1} parent=151 // pred_fallthru
          _
      $region152: #{tpu_custom_call.1} parent=25 // pred_fallthru
        _
      // Predicated region
      $region153: #{tpu_custom_call.1} parent=25 // pred_check
        _
      $region154: #{tpu_custom_call.1} parent=25 // pred_check_branch
        %222 = sbr.rel (0) target = $region156
      $region155: #{tpu_custom_call.1} parent=25 // pred_region
        %s224 = ssub.s32 2, 1
        loop: start=0, step=1, limit=1
        $region157: #{tpu_custom_call.1} parent=155 // loop_pre_header
          _
        $region158: #{tpu_custom_call.1} parent=155 // loop_header
          %s226 = sphi 0, %s230
          %p227 = scmp.ge.s32.totalorder %s226, 1
          %s231 = sphi %s217, %s217
          %s232 = sphi %s218, %s218
        $region159: #{tpu_custom_call.1} parent=155 // loop_header_branch
          %229 = sbr.rel (%p227) target = $region163
        $region160: #{tpu_custom_call.1} parent=155 // loop_body
          %v233 = vld [vmem:[%s231] sm:%s224]
          %234 = vst [vmem:[%s232] sm:%s224] %v233
        $region161: #{tpu_custom_call.1} parent=155 // loop_footer
          %s230 = sadd.s32 1, %s226
        $region162: #{tpu_custom_call.1} parent=155 // loop_footer_branch
          %225 = sbr.rel target = $region158
        $region163: #{tpu_custom_call.1} parent=155 // loop_exit
          _
      $region156: #{tpu_custom_call.1} parent=25 // pred_fallthru
        _
      // Predicated region
      $region175: #{tpu_custom_call.1} parent=25 // pred_check
        _
      $region176: #{tpu_custom_call.1} parent=25 // pred_check_branch
        %251 = sbr.rel (0) target = $region178
      $region177: #{tpu_custom_call.1} parent=25 // pred_region
        %252 = vsyncadd [#allocation3], 16
      $region178: #{tpu_custom_call.1} parent=25 // pred_fallthru
        _
      %s253 = sadd.s32 %s38, 5
      %s254 = sadd.s32 %s31, %s253
      %s255 = sld [smem:[#allocation5 + %s254]]
      %p256 = scmp.gt.s32.totalorder %s255, 0
      %s257 = scalar_select %p256, %s255, 0
      %p258 = scmp.lt.s32.totalorder %s257, 63
      %s259 = scalar_select %p258, %s257, 63
      %s260 = scalar_lea.vmem %s3, %s259
      %s261 = scalar_lea.vmem [#allocation2], %s253
      // Predicated region
      $region179: #{tpu_custom_call.1} parent=25 // pred_check
        _
      $region180: #{tpu_custom_call.1} parent=25 // pred_check_branch
        %263 = sbr.rel target = $region182
      $region181: #{tpu_custom_call.1} parent=25 // pred_region
        // Predicated region
        $region194: #{tpu_custom_call.1} parent=181 // pred_check
          _
        $region195: #{tpu_custom_call.1} parent=181 // pred_check_branch
          %279 = sbr.rel (0) target = $region197
        $region196: #{tpu_custom_call.1} parent=181 // pred_region
          %s281 = ssub.s32 2, 1
          loop: start=0, step=1, limit=1
          $region198: #{tpu_custom_call.1} parent=196 // loop_pre_header
            _
          $region199: #{tpu_custom_call.1} parent=196 // loop_header
            %s283 = sphi 0, %s287
            %p284 = scmp.ge.s32.totalorder %s283, 1
            %s288 = sphi %s260, %s260
            %s289 = sphi %s261, %s261
          $region200: #{tpu_custom_call.1} parent=196 // loop_header_branch
            %286 = sbr.rel (%p284) target = $region204
          $region201: #{tpu_custom_call.1} parent=196 // loop_body
            %v290 = vld [vmem:[%s288] sm:%s281]
            %291 = vst [vmem:[%s289] sm:%s281] %v290
          $region202: #{tpu_custom_call.1} parent=196 // loop_footer
            %s287 = sadd.s32 1, %s283
          $region203: #{tpu_custom_call.1} parent=196 // loop_footer_branch
            %282 = sbr.rel target = $region199
          $region204: #{tpu_custom_call.1} parent=196 // loop_exit
            _
        $region197: #{tpu_custom_call.1} parent=181 // pred_fallthru
          _
      $region182: #{tpu_custom_call.1} parent=25 // pred_fallthru
        _
      // Predicated region
      $region183: #{tpu_custom_call.1} parent=25 // pred_check
        _
      $region184: #{tpu_custom_call.1} parent=25 // pred_check_branch
        %265 = sbr.rel (0) target = $region186
      $region185: #{tpu_custom_call.1} parent=25 // pred_region
        %s267 = ssub.s32 2, 1
        loop: start=0, step=1, limit=1
        $region187: #{tpu_custom_call.1} parent=185 // loop_pre_header
          _
        $region188: #{tpu_custom_call.1} parent=185 // loop_header
          %s269 = sphi 0, %s273
          %p270 = scmp.ge.s32.totalorder %s269, 1
          %s274 = sphi %s260, %s260
          %s275 = sphi %s261, %s261
        $region189: #{tpu_custom_call.1} parent=185 // loop_header_branch
          %272 = sbr.rel (%p270) target = $region193
        $region190: #{tpu_custom_call.1} parent=185 // loop_body
          %v276 = vld [vmem:[%s274] sm:%s267]
          %277 = vst [vmem:[%s275] sm:%s267] %v276
        $region191: #{tpu_custom_call.1} parent=185 // loop_footer
          %s273 = sadd.s32 1, %s269
        $region192: #{tpu_custom_call.1} parent=185 // loop_footer_branch
          %268 = sbr.rel target = $region188
        $region193: #{tpu_custom_call.1} parent=185 // loop_exit
          _
      $region186: #{tpu_custom_call.1} parent=25 // pred_fallthru
        _
      // Predicated region
      $region205: #{tpu_custom_call.1} parent=25 // pred_check
        _
      $region206: #{tpu_custom_call.1} parent=25 // pred_check_branch
        %294 = sbr.rel (0) target = $region208
      $region207: #{tpu_custom_call.1} parent=25 // pred_region
        %295 = vsyncadd [#allocation3], 16
      $region208: #{tpu_custom_call.1} parent=25 // pred_fallthru
        _
      %s296 = sadd.s32 %s38, 6
      %s297 = sadd.s32 %s31, %s296
      %s298 = sld [smem:[#allocation5 + %s297]]
      %p299 = scmp.gt.s32.totalorder %s298, 0
      %s300 = scalar_select %p299, %s298, 0
      %p301 = scmp.lt.s32.totalorder %s300, 63
      %s302 = scalar_select %p301, %s300, 63
      %s303 = scalar_lea.vmem %s3, %s302
      %s304 = scalar_lea.vmem [#allocation2], %s296
      // Predicated region
      $region209: #{tpu_custom_call.1} parent=25 // pred_check
        _
      $region210: #{tpu_custom_call.1} parent=25 // pred_check_branch
        %306 = sbr.rel target = $region212
      $region211: #{tpu_custom_call.1} parent=25 // pred_region
        // Predicated region
        $region224: #{tpu_custom_call.1} parent=211 // pred_check
          _
        $region225: #{tpu_custom_call.1} parent=211 // pred_check_branch
          %322 = sbr.rel (0) target = $region227
        $region226: #{tpu_custom_call.1} parent=211 // pred_region
          %s324 = ssub.s32 2, 1
          loop: start=0, step=1, limit=1
          $region228: #{tpu_custom_call.1} parent=226 // loop_pre_header
            _
          $region229: #{tpu_custom_call.1} parent=226 // loop_header
            %s326 = sphi 0, %s330
            %p327 = scmp.ge.s32.totalorder %s326, 1
            %s331 = sphi %s303, %s303
            %s332 = sphi %s304, %s304
          $region230: #{tpu_custom_call.1} parent=226 // loop_header_branch
            %329 = sbr.rel (%p327) target = $region234
          $region231: #{tpu_custom_call.1} parent=226 // loop_body
            %v333 = vld [vmem:[%s331] sm:%s324]
            %334 = vst [vmem:[%s332] sm:%s324] %v333
          $region232: #{tpu_custom_call.1} parent=226 // loop_footer
            %s330 = sadd.s32 1, %s326
          $region233: #{tpu_custom_call.1} parent=226 // loop_footer_branch
            %325 = sbr.rel target = $region229
          $region234: #{tpu_custom_call.1} parent=226 // loop_exit
            _
        $region227: #{tpu_custom_call.1} parent=211 // pred_fallthru
          _
      $region212: #{tpu_custom_call.1} parent=25 // pred_fallthru
        _
      // Predicated region
      $region213: #{tpu_custom_call.1} parent=25 // pred_check
        _
      $region214: #{tpu_custom_call.1} parent=25 // pred_check_branch
        %308 = sbr.rel (0) target = $region216
      $region215: #{tpu_custom_call.1} parent=25 // pred_region
        %s310 = ssub.s32 2, 1
        loop: start=0, step=1, limit=1
        $region217: #{tpu_custom_call.1} parent=215 // loop_pre_header
          _
        $region218: #{tpu_custom_call.1} parent=215 // loop_header
          %s312 = sphi 0, %s316
          %p313 = scmp.ge.s32.totalorder %s312, 1
          %s317 = sphi %s303, %s303
          %s318 = sphi %s304, %s304
        $region219: #{tpu_custom_call.1} parent=215 // loop_header_branch
          %315 = sbr.rel (%p313) target = $region223
        $region220: #{tpu_custom_call.1} parent=215 // loop_body
          %v319 = vld [vmem:[%s317] sm:%s310]
          %320 = vst [vmem:[%s318] sm:%s310] %v319
        $region221: #{tpu_custom_call.1} parent=215 // loop_footer
          %s316 = sadd.s32 1, %s312
        $region222: #{tpu_custom_call.1} parent=215 // loop_footer_branch
          %311 = sbr.rel target = $region218
        $region223: #{tpu_custom_call.1} parent=215 // loop_exit
          _
      $region216: #{tpu_custom_call.1} parent=25 // pred_fallthru
        _
      // Predicated region
      $region235: #{tpu_custom_call.1} parent=25 // pred_check
        _
      $region236: #{tpu_custom_call.1} parent=25 // pred_check_branch
        %337 = sbr.rel (0) target = $region238
      $region237: #{tpu_custom_call.1} parent=25 // pred_region
        %338 = vsyncadd [#allocation3], 16
      $region238: #{tpu_custom_call.1} parent=25 // pred_fallthru
        _
      %s339 = sadd.s32 %s38, 7
      %s340 = sadd.s32 %s31, %s339
      %s341 = sld [smem:[#allocation5 + %s340]]
      %p342 = scmp.gt.s32.totalorder %s341, 0
      %s343 = scalar_select %p342, %s341, 0
      %p344 = scmp.lt.s32.totalorder %s343, 63
      %s345 = scalar_select %p344, %s343, 63
      %s346 = scalar_lea.vmem %s3, %s345
      %s347 = scalar_lea.vmem [#allocation2], %s339
      // Predicated region
      $region239: #{tpu_custom_call.1} parent=25 // pred_check
        _
      $region240: #{tpu_custom_call.1} parent=25 // pred_check_branch
        %349 = sbr.rel target = $region242
      $region241: #{tpu_custom_call.1} parent=25 // pred_region
        // Predicated region
        $region254: #{tpu_custom_call.1} parent=241 // pred_check
          _
        $region255: #{tpu_custom_call.1} parent=241 // pred_check_branch
          %365 = sbr.rel (0) target = $region257
        $region256: #{tpu_custom_call.1} parent=241 // pred_region
          %s367 = ssub.s32 2, 1
          loop: start=0, step=1, limit=1
          $region258: #{tpu_custom_call.1} parent=256 // loop_pre_header
            _
          $region259: #{tpu_custom_call.1} parent=256 // loop_header
            %s369 = sphi 0, %s373
            %p370 = scmp.ge.s32.totalorder %s369, 1
            %s374 = sphi %s346, %s346
            %s375 = sphi %s347, %s347
          $region260: #{tpu_custom_call.1} parent=256 // loop_header_branch
            %372 = sbr.rel (%p370) target = $region264
          $region261: #{tpu_custom_call.1} parent=256 // loop_body
            %v376 = vld [vmem:[%s374] sm:%s367]
            %377 = vst [vmem:[%s375] sm:%s367] %v376
          $region262: #{tpu_custom_call.1} parent=256 // loop_footer
            %s373 = sadd.s32 1, %s369
          $region263: #{tpu_custom_call.1} parent=256 // loop_footer_branch
            %368 = sbr.rel target = $region259
          $region264: #{tpu_custom_call.1} parent=256 // loop_exit
            _
        $region257: #{tpu_custom_call.1} parent=241 // pred_fallthru
          _
      $region242: #{tpu_custom_call.1} parent=25 // pred_fallthru
        _
      // Predicated region
      $region243: #{tpu_custom_call.1} parent=25 // pred_check
        _
      $region244: #{tpu_custom_call.1} parent=25 // pred_check_branch
        %351 = sbr.rel (0) target = $region246
      $region245: #{tpu_custom_call.1} parent=25 // pred_region
        %s353 = ssub.s32 2, 1
        loop: start=0, step=1, limit=1
        $region247: #{tpu_custom_call.1} parent=245 // loop_pre_header
          _
        $region248: #{tpu_custom_call.1} parent=245 // loop_header
          %s355 = sphi 0, %s359
          %p356 = scmp.ge.s32.totalorder %s355, 1
          %s360 = sphi %s346, %s346
          %s361 = sphi %s347, %s347
        $region249: #{tpu_custom_call.1} parent=245 // loop_header_branch
          %358 = sbr.rel (%p356) target = $region253
        $region250: #{tpu_custom_call.1} parent=245 // loop_body
          %v362 = vld [vmem:[%s360] sm:%s353]
          %363 = vst [vmem:[%s361] sm:%s353] %v362
        $region251: #{tpu_custom_call.1} parent=245 // loop_footer
          %s359 = sadd.s32 1, %s355
        $region252: #{tpu_custom_call.1} parent=245 // loop_footer_branch
          %354 = sbr.rel target = $region248
        $region253: #{tpu_custom_call.1} parent=245 // loop_exit
          _
      $region246: #{tpu_custom_call.1} parent=25 // pred_fallthru
        _
      // Predicated region
      $region265: #{tpu_custom_call.1} parent=25 // pred_check
        _
      $region266: #{tpu_custom_call.1} parent=25 // pred_check_branch
        %380 = sbr.rel (0) target = $region268
      $region267: #{tpu_custom_call.1} parent=25 // pred_region
        %381 = vsyncadd [#allocation3], 16
      $region268: #{tpu_custom_call.1} parent=25 // pred_fallthru
        _
    $region26: #{tpu_custom_call.1} parent=1 // loop_footer
      %s37 = sadd.s32 1, %s33
    $region27: #{tpu_custom_call.1} parent=1 // loop_footer_branch
      %32 = sbr.rel target = $region23
    $region28: #{tpu_custom_call.1} parent=1 // loop_exit
      _
    %v382 = vlaneseq
    %v383 = vshrl.u32 %v382, 7
    %v384 = vadd.s32 %v383, 8
    %v385 = vstv %s31
    %v386 = vadd.s32 %v385, %v383
    %v387 = vadd.s32 %v385, %v384
    %vm388 = vcmp.lt.s32.totalorder %v386, 0
    %v389 = vsub.s32 0, %v386
    %v390 = vsel %vm388, %v389, %v386
    %v391 = vshrl.u32 %v390, 3
    %v392 = vand.u32 %v390, 7
    %v393 = vsub.s32 0, %v392
    %v394 = vsel %vm388, %v393, %v392
    %vm395 = vcmp.lt.s32.totalorder %v387, 0
    %v396 = vsub.s32 0, %v387
    %v397 = vsel %vm395, %v396, %v387
    %v398 = vshrl.u32 %v397, 3
    %v399 = vand.u32 %v397, 7
    %v400 = vsub.s32 0, %v399
    %v401 = vsel %vm395, %v400, %v399
    %vm402 = vcmp.ne.s32.totalorder %v394, 0
    %vm403 = vcmp.ne.s32.totalorder %v401, 0
    %vm404 = vcmp.lt.s32.totalorder %v394, 0
    %vm405 = vcmp.lt.s32.totalorder %v401, 0
    %vm406 = vmand %vm404, %vm402
    %vm407 = vmand %vm405, %vm403
    %v408 = vadd.s32 %v394, 8
    %v409 = vadd.s32 %v401, 8
    %v410 = vsel %vm406, %v408, %v394
    %v411 = vsel %vm407, %v409, %v401
    %v412 = vld [vmem:[%s1] sm:$0xff]
    %v413 = vld [vmem:[%s1 + $0x8] sm:$0xff]
    %v414 = vadd.s32 %v412, 16
    %v415 = vadd.s32 %v413, 16
    %v416 = vld [vmem:[%s2] sm:$0xff]
    %v417 = vld [vmem:[%s2 + $0x8] sm:$0xff]
    %v418 = vadd.s32 %v416, 18
    %v419 = vadd.s32 %v417, 18
    %v420 = vlaneseq
    %v421 = vand.u32 %v420, 127
    %vm422 = vcmp.eq.s32.totalorder %v421, %v410
    %vm423 = vcmp.eq.s32.totalorder %v421, %v411
    %424 = vset.pattern.permute.xlu0 0
    %425 = vperm.xlu0 %424, %v414
    %v426 = vpop.permute.xlu0 %425
    %427 = vset.pattern.permute.xlu0 0
    %428 = vperm.xlu0 %427, %v415
    %v429 = vpop.permute.xlu0 %428
    %vm430 = vcmp.eq.s32.totalorder %v421, %v426
    %vm431 = vcmp.eq.s32.totalorder %v421, %v429
    %vm432 = vmor %vm422, %vm430
    %vm433 = vmor %vm423, %vm431
    %434 = vset.pattern.permute.xlu0 0
    %435 = vperm.xlu0 %434, %v418
    %v436 = vpop.permute.xlu0 %435
    %437 = vset.pattern.permute.xlu0 0
    %438 = vperm.xlu0 %437, %v419
    %v439 = vpop.permute.xlu0 %438
    %vm440 = vcmp.eq.s32.totalorder %v421, %v436
    %vm441 = vcmp.eq.s32.totalorder %v421, %v439
    %vm442 = vmor %vm432, %vm440
    %vm443 = vmor %vm433, %vm441
    %v444 = vsel %vm442, 1, 0
    %v445 = vsel %vm443, 1, 0
    %v446 = vcvt.s32.f32 %v444
    %v447 = vcvt.s32.f32 %v445
    %v448 = vld [vmem:[%s4] sm:$0xff]
    %v449 = vld [vmem:[%s4 + $0x8] sm:$0xff]
    %v450 = vld [vmem:[%s4 + $0x10] sm:$0xff]
    %v451 = vld [vmem:[%s4 + $0x18] sm:$0x3]
    %vm452 = vcmask 211968
    %v454 = vsel %vm452, %v446, 0
    %v457 = vsel %vm452, %v447, 0
    %vm459 = vcmask 1041408
    %v461 = vsel %vm459, %v451, 0
    %463 = vmatpush.msra.mxu0 0.0
    %464 = vmatpush.msra.mxu0 0.0
    %465 = vmatpush.msra.mxu0 0.0
    %466 = vmatpush.msra.mxu0 0.0
    %467 = vmatpush.msra.mxu0 0.0
    %468 = vmatpush.msra.mxu0 0.0
    %469 = vmatpush.msra.mxu0 0.0
    %470 = vmatpush.msra.mxu0 0.0
    %471 = vmatpush.msra.mxu0 0.0
    %472 = vmatpush.msra.mxu0 0.0
    %473 = vmatpush.msra.mxu0 0.0
    %474 = vmatpush.msra.mxu0 0.0
    %475 = vmatpush.msra.mxu0 %v461
    %476 = vmatpush.msra.mxu0 %v450
    %477 = vmatpush.msra.mxu0 %v449
    %478 = vmatpush.msra.mxu0 %v448
    %479 = vmatmul.f32.gmra.mxu0 %v454
    %v480 = vpop.f32.mrf.mxu0
    %v481 = vadd.f32 0.0, %v480
    %482 = vmatmul.f32.gmra.mxu0 %v457
    %v483 = vpop.f32.mrf.mxu0
    %v484 = vadd.f32 0.0, %v483
    %485 = vdwg.mxu0
    loop: start=0, step=1, limit=2
    $region269: #{tpu_custom_call.1} parent=1 // loop_pre_header
      _
    $region270: #{tpu_custom_call.1} parent=1 // loop_header
      %s487 = sphi 0, %s491
      %p488 = scmp.ge.s32.totalorder %s487, 2
    $region271: #{tpu_custom_call.1} parent=1 // loop_header_branch
      %490 = sbr.rel (%p488) target = $region275
    $region272: #{tpu_custom_call.1} parent=1 // loop_body
      %s492 = smul.u32 1, 1
      %s493 = sshll.u32 %s492, 4
      %494 = dma.done [#allocation3], %s493
      %s495 = sshll.u32 %s492, 4
      %496 = dma.done [#allocation3], %s495
      %s497 = sshll.u32 %s492, 4
      %498 = dma.done [#allocation3], %s497
      %s499 = sshll.u32 %s492, 4
      %500 = dma.done [#allocation3], %s499
      %s501 = sshll.u32 %s492, 4
      %502 = dma.done [#allocation3], %s501
      %s503 = sshll.u32 %s492, 4
      %504 = dma.done [#allocation3], %s503
      %s505 = sshll.u32 %s492, 4
      %506 = dma.done [#allocation3], %s505
      %s507 = sshll.u32 %s492, 4
      %508 = dma.done [#allocation3], %s507
    $region273: #{tpu_custom_call.1} parent=1 // loop_footer
      %s491 = sadd.s32 1, %s487
    $region274: #{tpu_custom_call.1} parent=1 // loop_footer_branch
      %486 = sbr.rel target = $region270
    $region275: #{tpu_custom_call.1} parent=1 // loop_exit
      _
    %v509 = vld [vmem:[#allocation2] sm:$0xff]
    %v510 = vld [vmem:[#allocation2 + $0x8] sm:$0xff]
    %v511 = vadd.f32 %v509, %v481
    %v512 = vadd.f32 %v510, %v484
    %vm513 = vcmask 261120
    %v514 = vsel %vm513, %v511, 0.0
    %515 = vadd.xlane.f32.xlu0 %v514
    %v516 = vpop.xlane.xlu0 %515
    %v517 = vsel %vm513, %v512, 0.0
    %518 = vadd.xlane.f32.xlu0 %v517
    %v519 = vpop.xlane.xlu0 %518
    %v520 = vrcp.pop 32.0
    %v521 = vmul.f32 32.0, %v520
    %v522 = vsub.f32 1.0, %v521
    %v523 = vmul.f32 %v520, %v522
    %v524 = vadd.f32 %v520, %v523
    %vm525 = vweird.f32 %v520
    %v526 = vsel %vm525, %v520, %v524
    %v527 = vmul.f32 %v516, %v526
    %v528 = vmul.f32 %v519, %v526
    %v529 = vsub.f32 %v511, %v527
    %v530 = vsub.f32 %v512, %v528
    %v531 = vmul.f32 %v529, %v529
    %v532 = vmul.f32 %v530, %v530
    %v533 = vsel %vm513, %v531, 0.0
    %534 = vadd.xlane.f32.xlu0 %v533
    %v535 = vpop.xlane.xlu0 %534
    %v536 = vsel %vm513, %v532, 0.0
    %537 = vadd.xlane.f32.xlu0 %v536
    %v538 = vpop.xlane.xlu0 %537
    %v539 = vmul.f32 %v535, %v526
    %v540 = vmul.f32 %v538, %v526
    %v541 = vadd.f32 %v539, 1e-12
    %v542 = vadd.f32 %v540, 1e-12
    %v543 = vrsqrt.pop %v541
    %v544 = vmul.f32 %v543, %v541
    %v545 = vmul.f32 %v544, %v543
    %v546 = vmul.f32 0.5, %v545
    %v547 = vsub.f32 1.5, %v546
    %v548 = vmul.f32 %v543, %v547
    %vm549 = vweird.f32 %v541
    %vm550 = vweird.f32 %v543
    %vm551 = vmor %vm549, %vm550
    %v552 = vsel %vm551, %v543, %v548
    %v553 = vrsqrt.pop %v542
    %v554 = vmul.f32 %v553, %v542
    %v555 = vmul.f32 %v554, %v553
    %v556 = vmul.f32 0.5, %v555
    %v557 = vsub.f32 1.5, %v556
    %v558 = vmul.f32 %v553, %v557
    %vm559 = vweird.f32 %v542
    %vm560 = vweird.f32 %v553
    %vm561 = vmor %vm559, %vm560
    %v562 = vsel %vm561, %v553, %v558
    %v563 = vmul.f32 %v529, %v552
    %v564 = vmul.f32 %v530, %v562
    %v565 = vld [vmem:[%s5] sm:$0x1]
    %v567 = vperm.slane %v565, 0
    %v569 = vmul.f32 %v567, %v563
    %v570 = vmul.f32 %v567, %v564
    %v571 = vld [vmem:[%s6] sm:$0x1]
    %v573 = vperm.slane %v571, 0
    %v575 = vadd.f32 %v569, %v573
    %v576 = vadd.f32 %v570, %v573
    %577 = vst.msk [vmem:[#allocation6] sm:$0xff] %vm513, %v575
    %578 = vst.msk [vmem:[#allocation6 + $0x8] sm:$0xff] %vm513, %v576
    // Predicated region
    $region276: #{tpu_custom_call.1} parent=1 // pred_check
      _
    $region277: #{tpu_custom_call.1} parent=1 // pred_check_branch
      %580 = sbr.rel (0) target = $region279
    $region278: #{tpu_custom_call.1} parent=1 // pred_region
      %582 = vsyncadd [#allocation7], 0
      %s583 = sshll.u32 [#allocation6], 4
      %s584 = int_to_ptr.vmem [resolvable:$true] %s583
      %s585 = sshll.u32 %s7, 4
      %s586 = int_to_ptr.hbm [resolvable:$true] %s585
      %591 = dma.vmem_to_hbm [thread:$0]  %s584, 256, %s586, [#allocation7], 128, 128, 8
    $region279: #{tpu_custom_call.1} parent=1 // pred_fallthru
      _
    // Predicated region
    $region280: #{tpu_custom_call.1} parent=1 // pred_check
      _
    $region281: #{tpu_custom_call.1} parent=1 // pred_check_branch
      %593 = sbr.rel (0) target = $region283
    $region282: #{tpu_custom_call.1} parent=1 // pred_region
      %595 = dma.done [#allocation7], 256
    $region283: #{tpu_custom_call.1} parent=1 // pred_fallthru
      _
    %596 = vsyncpa [#allocation7], 1
  %597 = vsyncmov [#allocation3]
  %s598 = vpop.sfrf %597
  %p599 = scmp.eq.s32.totalorder %s598, 0
  %p600 = pneg %p599
  %602 = shalt.err (%p600)

</llo_original>
